<compile_context>
chip_gen: v7x
topology: tpu7x:2x2x1
jax: 0.10.0
libtpu: 0.0.40
codegen_flags: <defaults>
</compile_context>

<pallas_src>
import functools

import jax
import jax.numpy as jnp
from jax.experimental import pallas as pl
from jax.experimental.pallas import tpu as pltpu


def _round_up(v, m):
    return ((v + m - 1) // m) * m


def _pick_tf(F, tb, tc, in_itemsize, out_itemsize, budget=24 << 20):
    """Largest K tile that divides F and keeps the double-buffered footprint
    under `budget` (inside the 32 MiB scoped-VMEM request on v5e/v6e/v7x)."""
    def footprint(tf):
        return (2 * (tb * tf + tf * tc) * in_itemsize   # double-buffered x / w tiles
                + tb * tc * 4                           # f32 accumulator scratch
                + 2 * tb * tc * out_itemsize            # double-buffered output tile
                + 4 * tc * 4)                           # bias (tiny)
    if footprint(F) <= budget:
        return F                                        # single k step, no acc scratch
    start = min((F // 128) * 128, 4096)
    for tf in range(start, 0, -128):
        if F % tf == 0 and footprint(tf) <= budget:
            return tf
    # TODO(synk): ragged F (not a multiple of 128) with F too large for VMEM
    # needs a masked remainder K chunk; fall back to the full extent.
    return F


# ----------------------------------------------------------------------------
# SVM.forward : y = x @ W^T + b    (nn.Linear, weight layout [n_class, n_feature])
# ----------------------------------------------------------------------------
def _linear_single_k_kernel(x_ref, wt_ref, b_ref, o_ref, *, mxu_dtype):
    x = x_ref[...]
    w = wt_ref[...]
    if mxu_dtype is not None:
        x = x.astype(mxu_dtype)
        w = w.astype(mxu_dtype)
    o_ref[...] = (jnp.dot(x, w, preferred_element_type=jnp.float32)
                  + b_ref[...].astype(jnp.float32)).astype(o_ref.dtype)


def _linear_acc_kernel(x_ref, wt_ref, b_ref, o_ref, acc_ref, *, mxu_dtype):
    k = pl.program_id(2)

    @pl.when(k == 0)
    def _():
        acc_ref[...] = jnp.zeros_like(acc_ref)

    x = x_ref[...]
    w = wt_ref[...]
    if mxu_dtype is not None:
        x = x.astype(mxu_dtype)
        w = w.astype(mxu_dtype)
    acc_ref[...] += jnp.dot(x, w, preferred_element_type=jnp.float32)

    @pl.when(k == pl.num_programs(2) - 1)
    def _():
        o_ref[...] = (acc_ref[...] + b_ref[...].astype(jnp.float32)).astype(o_ref.dtype)


def svm_forward(x, w, b, *, out_dtype=None, mxu_dtype=None, tf=None):
    """x: [B, F], w: [C, F], b: [C]  ->  [B, C]   (== nn.Linear forward)."""
    B, F = x.shape
    C, F2 = w.shape
    assert F == F2 and b.shape == (C,)
    out_dtype = jnp.dtype(out_dtype or x.dtype)

    # One-time wrapper-side transpose (amortized across calls by XLA CSE if the
    # weight is a constant parameter).
    wt = jnp.transpose(w)          # [F, C]
    b2d = b.reshape(1, C)

    # Batch/class tiles: up to 256 wide (fills v6e/v7x 2x256^2 MXU; still fine
    # on v5e's 4x128^2), never smaller than the full small dim -- a B=16 batch
    # is one grid step, not two 8-row steps.
    tb = B if B <= 256 else 256
    tc = C if C <= 256 else 256
    if tf is None:
        tf = _pick_tf(F, tb, tc, x.dtype.itemsize, out_dtype.itemsize)
    assert tf == F or F % tf == 0, "K tile must divide F (no padded-K blocks)"

    nb, nc, nk = pl.cdiv(B, tb), pl.cdiv(C, tc), pl.cdiv(F, tf)
    cparams = pltpu.CompilerParams(
        dimension_semantics=("parallel", "parallel") + (("arbitrary",) if nk > 1 else ()),
        vmem_limit_bytes=32 * 1024 * 1024,
    )

    if nk == 1:
        # Single K step: no accumulator scratch, no zero-init, dot+bias straight
        # to the output tile.
        kernel = functools.partial(_linear_single_k_kernel, mxu_dtype=mxu_dtype)
        return pl.pallas_call(
            kernel,
            out_shape=jax.ShapeDtypeStruct((B, C), out_dtype),
            grid=(nb, nc),
            in_specs=[
                pl.BlockSpec((tb, tf), lambda i, j: (i, 0)),
                pl.BlockSpec((tf, tc), lambda i, j: (0, j)),
                pl.BlockSpec((1, tc), lambda i, j: (0, j)),
            ],
            out_specs=pl.BlockSpec((tb, tc), lambda i, j: (i, j)),
            compiler_params=cparams,
        )(x, wt, b2d)

    kernel = functools.partial(_linear_acc_kernel, mxu_dtype=mxu_dtype)
    return pl.pallas_call(
        kernel,
        out_shape=jax.ShapeDtypeStruct((B, C), out_dtype),
        grid=(nb, nc, nk),                                   # reduction axis last
        in_specs=[
            pl.BlockSpec((tb, tf), lambda i, j, k: (i, k)),
            pl.BlockSpec((tf, tc), lambda i, j, k: (k, j)),
            pl.BlockSpec((1, tc), lambda i, j, k: (0, j)),
        ],
        out_specs=pl.BlockSpec((tb, tc), lambda i, j, k: (i, j)),
        scratch_shapes=[pltpu.VMEM((tb, tc), jnp.float32)],
        compiler_params=cparams,
    )(x, wt, b2d)


# ----------------------------------------------------------------------------
# Standalone multi-class hinge loss (Crammer-Singer style) on precomputed logits.
# ----------------------------------------------------------------------------
def _hinge_kernel(logits_ref, y_ref, part_ref, *, margin, p, total_b, tb):
    i = pl.program_id(0)
    c = logits_ref.shape[1]
    nblk = c // 128
    y = y_ref[...]                                            # (tb, 1) int32

    # Pass 1: gather the correct-class logit per row, chunked over lane blocks
    # (no full-(tb,C) temporaries).
    out_y = jnp.zeros((tb, 1), jnp.float32)
    for blk in range(nblk):
        o_blk = logits_ref[:, blk * 128:(blk + 1) * 128].astype(jnp.float32)
        cls = jax.lax.broadcasted_iota(jnp.int32, (tb, 128), 1) + blk * 128
        out_y = out_y + jnp.sum(jnp.where(cls == y, o_blk, 0.0),
                                axis=1, keepdims=True)

    # Pass 2: hinge, accumulated into a lane-dense (tb,128) partial.
    part = jnp.zeros((tb, 128), jnp.float32)
    for blk in range(nblk):
        o_blk = logits_ref[:, blk * 128:(blk + 1) * 128].astype(jnp.float32)
        cls = jax.lax.broadcasted_iota(jnp.int32, (tb, 128), 1) + blk * 128
        h = jnp.maximum(o_blk - out_y + jnp.float32(margin), 0.0)
        h = jnp.where(cls == y, 0.0, h)                      # zero the correct class
        if p == 2:
            h = h * h
        elif p != 1:
            h = h ** p
        part = part + h

    # Mask padded rows of the last partial batch tile BEFORE anything leaves the
    # kernel (padded rows read uninitialized VMEM; jnp.where select is NaN-safe).
    row_ids = jax.lax.broadcasted_iota(jnp.int32, (tb, 1), 0) + i * tb
    part = jnp.where(row_ids < total_b, part, 0.0)

    # Fold sublane groups -> lane-dense (8,128) per-tile partial; the final
    # cross-lane reduce happens once in the wrapper.
    folded = jnp.sum(part.reshape(tb // 8, 8, 128), axis=0)
    part_ref[...] = folded[None]


def multi_class_hinge_loss(output, y, *, p=1, margin=20, size_average=True, tb=None):
    """output: [B, C] float (any dtype), y: [B] int -> scalar float32 loss."""
    b, c = output.shape
    assert c % 128 == 0, "num_classes must be a multiple of 128 (lane width)"
    # TODO(synk): support ragged class counts via a masked remainder lane chunk.

    itemsize = output.dtype.itemsize
    sub = 8 * max(1, 4 // itemsize)          # 8 f32 / 16 bf16 / 32 int8 sublane granule
    if tb is None:
        # ~8 MiB per logits buffer (double-buffered ~16 MiB) stays inside the
        # 32 MiB scoped-VMEM request on v5e/v6e/v7x.
        bytes_per_row = max(c * itemsize, 1)
        tb = min((8 << 20) // bytes_per_row, _round_up(b, sub))
        tb = max(sub, (tb // sub) * sub)
    tb = int(tb)
    assert tb % 8 == 0

    y2d = y.astype(jnp.int32).reshape(b, 1)
    nb = pl.cdiv(b, tb)

    kernel = functools.partial(_hinge_kernel, margin=margin, p=p, total_b=b, tb=tb)

    parts = pl.pallas_call(
        kernel,
        out_shape=jax.ShapeDtypeStruct((nb, 8, 128), jnp.float32),
        grid=(nb,),
        in_specs=[
            pl.BlockSpec((tb, c), lambda i: (i, 0)),   # native dtype, upcast in vregs
            pl.BlockSpec((tb, 1), lambda i: (i, 0)),   # labels
        ],
        out_specs=pl.BlockSpec((1, 8, 128), lambda i: (i, 0, 0)),
        compiler_params=pltpu.CompilerParams(
            dimension_semantics=("parallel",),         # independent per-tile partials
            vmem_limit_bytes=32 * 1024 * 1024,
        ),
    )(output, y2d)

    loss = jnp.sum(parts)
    if size_average:
        loss = loss / jnp.float32(b * c)
    return loss


# ----------------------------------------------------------------------------
# Fused forward + hinge loss: hinge computed in the matmul's final-k epilogue on
# the resident accumulator tile -- no B x C logits HBM round trip for the loss.
# ----------------------------------------------------------------------------
def _fused_kernel(x_ref, wt_ref, b_ref, y_ref, o_ref, lpart_ref, acc_ref, *,
                  margin, p, total_b, tb, mxu_dtype):
    i = pl.program_id(0)
    k = pl.program_id(1)

    @pl.when(k == 0)
    def _():
        acc_ref[...] = jnp.zeros_like(acc_ref)

    xk = x_ref[...]
    wk = wt_ref[...]
    if mxu_dtype is not None:
        xk = xk.astype(mxu_dtype)
        wk = wk.astype(mxu_dtype)
    acc_ref[...] += jnp.dot(xk, wk, preferred_element_type=jnp.float32)

    @pl.when(k == pl.num_programs(1) - 1)
    def _():
        logits = acc_ref[...] + b_ref[...].astype(jnp.float32)   # (tb, C) f32
        o_ref[...] = logits.astype(o_ref.dtype)                  # forward output

        y = y_ref[...]                                           # (tb, 1) int32
        tb_, c_ = logits.shape
        cls = jax.lax.broadcasted_iota(jnp.int32, (tb_, c_), 1)
        is_y = cls == y
        out_y = jnp.sum(jnp.where(is_y, logits, 0.0), axis=1, keepdims=True)
        h = jnp.maximum(logits - out_y + jnp.float32(margin), 0.0)
        h = jnp.where(is_y, 0.0, h)
        if p == 2:
            h = h * h
        elif p != 1:
            h = h ** p

        rows = jnp.sum(h, axis=1, keepdims=True)                 # (tb, 1)
        row_ids = jax.lax.broadcasted_iota(jnp.int32, (tb_, 1), 0) + i * tb
        rows = jnp.where(row_ids < total_b, rows, 0.0)           # mask padded rows
        total = jnp.sum(rows)

        subl = jax.lax.broadcasted_iota(jnp.int32, (8, 128), 0)
        lane = jax.lax.broadcasted_iota(jnp.int32, (8, 128), 1)
        lpart_ref[...] = jnp.where((subl == 0) & (lane == 0), total, 0.0)[None]


def svm_forward_and_hinge_loss(x, w, b, y, *, p=1, margin=20, size_average=True,
                               out_dtype=None, mxu_dtype=None, tf=None):
    """Returns (logits [B,C], scalar loss). Classes are kept as one tile."""
    B, F = x.shape
    C, F2 = w.shape
    assert F == F2 and b.shape == (C,) and y.shape == (B,)
    out_dtype = jnp.dtype(out_dtype or x.dtype)

    wt = jnp.transpose(w)
    b2d = b.reshape(1, C)
    y2d = y.astype(jnp.int32).reshape(B, 1)

    tb = B if B <= 256 else 256
    tc = C   # hinge needs the full class row resident; TODO(synk): class-tiled hinge
    if tf is None:
        tf = _pick_tf(F, tb, tc, x.dtype.itemsize, out_dtype.itemsize)
    assert tf == F or F % tf == 0

    nb, nk = pl.cdiv(B, tb), pl.cdiv(F, tf)
    kernel = functools.partial(_fused_kernel, margin=margin, p=p, total_b=B,
                               tb=tb, mxu_dtype=mxu_dtype)

    logits, lparts = pl.pallas_call(
        kernel,
        out_shape=(jax.ShapeDtypeStruct((B, C), out_dtype),
                   jax.ShapeDtypeStruct((nb, 8, 128), jnp.float32)),
        grid=(nb, nk),                                           # reduction axis last
        in_specs=[
            pl.BlockSpec((tb, tf), lambda i, k: (i, k)),
            pl.BlockSpec((tf, tc), lambda i, k: (k, 0)),
            pl.BlockSpec((1, tc), lambda i, k: (0, 0)),
            pl.BlockSpec((tb, 1), lambda i, k: (i, 0)),
        ],
        out_specs=(pl.BlockSpec((tb, tc), lambda i, k: (i, 0)),
                   pl.BlockSpec((1, 8, 128), lambda i, k: (i, 0, 0))),
        scratch_shapes=[pltpu.VMEM((tb, tc), jnp.float32)],
        compiler_params=pltpu.CompilerParams(
            dimension_semantics=("parallel", "arbitrary"),
            vmem_limit_bytes=32 * 1024 * 1024,
        ),
    )(x, wt, b2d, y2d)

    loss = jnp.sum(lparts)
    if size_average:
        loss = loss / jnp.float32(B * C)
    return logits, loss


# ----------------------------------------------------------------------------
# Pure-JAX references
# ----------------------------------------------------------------------------
def _linear_reference(x, w, b):
    return (jax.lax.dot_general(
        x, w, dimension_numbers=(((1,), (1,)), ((), ())),
        preferred_element_type=jnp.float32).astype(x.dtype) + b)


def _hinge_reference(output, y, *, p=1, margin=20, size_average=True):
    o = output.astype(jnp.float32)
    b = o.shape[0]
    out_y = o[jnp.arange(b), y][:, None]
    loss = o - out_y + margin
    loss = loss.at[jnp.arange(b), y].set(0.0)
    loss = jnp.maximum(loss, 0.0)
    if p != 1:
        loss = loss ** p
    return loss.mean() if size_average else loss.sum()


if __name__ == "__main__":
    key = jax.random.PRNGKey(0)
    k1, k2, k3, k4, k5, k6 = jax.random.split(key, 6)

    # --- SVM.forward (the module spec): nn.Linear(n_feature=256, n_class=128) --
    B, F, C = 16, 256, 128
    x = jax.random.normal(k1, (B, F), dtype=jnp.float32)
    w = jax.random.normal(k2, (C, F), dtype=jnp.float32) * 0.05
    bias = jax.random.normal(k3, (C,), dtype=jnp.float32)
    ref = _linear_reference(x, w, bias)

    # single-K specialized path (no accumulator scratch)
    out = svm_forward(x, w, bias)
    jax.block_until_ready(out)
    assert out.shape == (B, C)
    assert jnp.allclose(out, ref, rtol=1e-3, atol=1e-3), (
        float(jnp.max(jnp.abs(out - ref))))

    # multi-K accumulator path (force tf=128 -> 2 k-steps)
    out_mk = svm_forward(x, w, bias, tf=128)
    jax.block_until_ready(out_mk)
    assert jnp.allclose(out_mk, ref, rtol=1e-3, atol=1e-3), (
        float(jnp.max(jnp.abs(out_mk - ref))))

    # bf16 MXU-operand path (cast inside the kernel, f32 accumulation)
    out_bf16 = svm_forward(x, w, bias, mxu_dtype=jnp.bfloat16)
    jax.block_until_ready(out_bf16)
    assert jnp.allclose(out_bf16, ref, rtol=5e-2, atol=1e-1), (
        float(jnp.max(jnp.abs(out_bf16 - ref))))

    # --- standalone hinge loss (batch-tiled, parallel per-tile partials) ------
    Bh, Ch = 20, 512
    logits = jax.random.normal(k4, (Bh, Ch), dtype=jnp.float32) * 5.0
    labels = jax.random.randint(k5, (Bh,), 0, Ch, dtype=jnp.int32)

    # tb=16 forces a 2-step grid with a partially padded last tile.
    loss = multi_class_hinge_loss(logits, labels, p=1, margin=20,
                                  size_average=True, tb=16)
    jax.block_until_ready(loss)
    lref = _hinge_reference(logits, labels, p=1, margin=20, size_average=True)
    assert jnp.allclose(loss, lref, rtol=1e-4, atol=1e-3), (loss, lref)

    # bf16 logits: DMA stays bf16 (half the HBM bytes), upcast in vregs.
    logits_bf16 = logits.astype(jnp.bfloat16)
    loss_bf16 = multi_class_hinge_loss(logits_bf16, labels, p=1, margin=20,
                                       size_average=True, tb=16)
    jax.block_until_ready(loss_bf16)
    lref_bf16 = _hinge_reference(logits_bf16, labels, p=1, margin=20,
                                 size_average=True)
    assert jnp.allclose(loss_bf16, lref_bf16, rtol=1e-4, atol=1e-3), (
        loss_bf16, lref_bf16)

    # --- fused forward + hinge (no logits HBM round trip for the loss) --------
    labels2 = jax.random.randint(k6, (B,), 0, C, dtype=jnp.int32)
    logits_f, loss_f = svm_forward_and_hinge_loss(x, w, bias, labels2,
                                                  p=1, margin=20,
                                                  size_average=True, tf=128)
    jax.block_until_ready(loss_f)
    assert jnp.allclose(logits_f, ref, rtol=1e-3, atol=1e-3)
    lref_f = _hinge_reference(ref, labels2, p=1, margin=20, size_average=True)
    assert jnp.allclose(loss_f, lref_f, rtol=1e-4, atol=1e-3), (loss_f, lref_f)

    print("KERNEL_OK")
</pallas_src>

<mosaic_0001>
module attributes {stable_mosaic.version = 11 : i64} {
  func.func @_linear_single_k_kernel(%arg0: i32, %arg1: i32, %arg2: memref<16x256xf32, #tpu.memory_space<vmem>>, %arg3: memref<256x128xf32, #tpu.memory_space<vmem>>, %arg4: memref<1x128xf32, #tpu.memory_space<vmem>>, %arg5: memref<16x128xf32, #tpu.memory_space<vmem>>) attributes {dimension_semantics = [#tpu.dimension_semantics<parallel>, #tpu.dimension_semantics<parallel>], iteration_bounds = array<i64: 1, 1>, scalar_prefetch = 0 : i64, scratch_operands = 0 : i64, tpu.core_type = #tpu.core_type<tc>, window_params = [{transform_indices = @transform_0, window_bounds = array<i64: 16, 256>}, {transform_indices = @transform_1, window_bounds = array<i64: 256, 128>}, {transform_indices = @transform_2, window_bounds = array<i64: 1, 128>}, {transform_indices = @transform_3, window_bounds = array<i64: 16, 128>}]} {
    %c0 = arith.constant 0 : index
    %c0_0 = arith.constant 0 : index
    %0 = vector.load %arg2[%c0, %c0_0] : memref<16x256xf32, #tpu.memory_space<vmem>>, vector<16x256xf32>
    %c0_1 = arith.constant 0 : index
    %c0_2 = arith.constant 0 : index
    %1 = vector.load %arg3[%c0_1, %c0_2] : memref<256x128xf32, #tpu.memory_space<vmem>>, vector<256x128xf32>
    %cst = arith.constant dense<0.000000e+00> : vector<16x128xf32>
    %2 = tpu.matmul %0, %1, %cst {dimension_numbers = #tpu.dot_dimension_numbers<[1], [0], [0], [1], [0, 0, 1, 1], [], []>} : vector<16x256xf32>, vector<256x128xf32>, vector<16x128xf32> -> vector<16x128xf32>
    %c0_3 = arith.constant 0 : index
    %c0_4 = arith.constant 0 : index
    %3 = vector.load %arg4[%c0_3, %c0_4] : memref<1x128xf32, #tpu.memory_space<vmem>>, vector<1x128xf32>
    %4 = vector.broadcast %3 : vector<1x128xf32> to vector<16x128xf32>
    %5 = arith.addf %2, %4 : vector<16x128xf32>
    %c0_5 = arith.constant 0 : index
    %c0_6 = arith.constant 0 : index
    %6 = vector.load %arg5[%c0_5, %c0_6] : memref<16x128xf32, #tpu.memory_space<vmem>>, vector<16x128xf32>
    tpu.vector_store %arg5[%c0_5, %c0_6], %5 {strides = array<i32>} : memref<16x128xf32, #tpu.memory_space<vmem>>, vector<16x128xf32>,
    return
  }
  func.func @transform_0(%arg0: i32, %arg1: i32) -> (i32, i32) {
    %c0_i32 = arith.constant 0 : i32
    %c0_i32_0 = arith.constant 0 : i32
    return %arg0, %c0_i32 : i32, i32
  }
  func.func @transform_1(%arg0: i32, %arg1: i32) -> (i32, i32) {
    %c0_i32 = arith.constant 0 : i32
    %c0_i32_0 = arith.constant 0 : i32
    return %c0_i32, %arg1 : i32, i32
  }
  func.func @transform_2(%arg0: i32, %arg1: i32) -> (i32, i32) {
    %c0_i32 = arith.constant 0 : i32
    %c0_i32_0 = arith.constant 0 : i32
    return %c0_i32, %arg1 : i32, i32
  }
  func.func @transform_3(%arg0: i32, %arg1: i32) -> (i32, i32) {
    %c0_i32 = arith.constant 0 : i32
    return %arg0, %arg1 : i32, i32
  }
}

</mosaic_0001>

<llo_original>
// kernel: tpu_custom_call.1
$region0: #{tpu_custom_call.1}
  #allocation0 [shape = 'u32[]', space=smem, size = 0x4, offset = 0x4, fixed_abs, tag = 'smem constant byte address 0x4 - core index']
  #allocation1 [shape = 'u32[144,128]{1,0:T(1,128)}', space=vmem, size = 0x12000, scoped, tag = 'internal scratch']
  %s0 = inlined_call_operand.hbm [shape: f32[16,256], index: 0, kind: input, shape index: {}]
  %s1 = inlined_call_operand.hbm [shape: f32[256,128], index: 1, kind: input, shape index: {}]
  %s2 = inlined_call_operand.vmem [shape: f32[1,128], index: 2, kind: input, shape index: {}]
  %s3 = inlined_call_operand.hbm [shape: f32[16,128], index: 3, kind: output, shape index: {}]
  %s4 = sld [smem:[#allocation0]]
  $region30: #{tpu_custom_call.1} parent=0
    _
  %s6 = ssub.s32 1, %s4
  %s7 = scalar_select 0, %s6, %s4
  $region1: #{tpu_custom_call.1} parent=0
    #allocation2 [shape = 'u8[16384]{0}', space=vmem, size = 0x4000, scoped, tag = 'input window, operand 0, single buffered']
    #allocation3 [shape = 's32[1]{0}', space=sflag, size = 0x4, scoped, tag = 'scoped memory for tpu_custom_call.1']
    #allocation4 [shape = 's32[1]{0}', space=sflag, size = 0x4, scoped, tag = 'scoped memory for tpu_custom_call.1']
    #allocation5 [shape = 'u8[131072]{0}', space=vmem, size = 0x20000, scoped, tag = 'input window, operand 1, single buffered']
    #allocation6 [shape = 's32[1]{0}', space=sflag, size = 0x4, scoped, tag = 'scoped memory for tpu_custom_call.1']
    #allocation7 [shape = 'u8[8192]{0}', space=vmem, size = 0x2000, scoped, tag = 'output window, operand 0, single buffered']
    %8 = vsyncpa [#allocation3], 0
    %9 = vsyncpa [#allocation6], 0
    %10 = vsyncpa [#allocation4], 0
    // Predicated region
    $region2: #{tpu_custom_call.1} parent=1 // pred_check
      _
    $region3: #{tpu_custom_call.1} parent=1 // pred_check_branch
      %12 = sbr.rel (0) target = $region5
    $region4: #{tpu_custom_call.1} parent=1 // pred_region
      %s14 = ssub.s32 512, 512
      %15 = vsyncadd [#allocation3], %s14
      %s16 = sshll.u32 [#allocation2], 4
      %s17 = int_to_ptr.vmem [resolvable:$true] %s16
      %22 = dma.hbm_to_vmem [thread:$0]  %s0, 512, %s17, [#allocation3], 256, 256, 16
    $region5: #{tpu_custom_call.1} parent=1 // pred_fallthru
      _
    // Predicated region
    $region6: #{tpu_custom_call.1} parent=1 // pred_check
      _
    $region7: #{tpu_custom_call.1} parent=1 // pred_check_branch
      %24 = sbr.rel (0) target = $region9
    $region8: #{tpu_custom_call.1} parent=1 // pred_region
      %s26 = ssub.s32 4096, 4096
      %27 = vsyncadd [#allocation6], %s26
      %s28 = sshll.u32 [#allocation5], 4
      %s29 = int_to_ptr.vmem [resolvable:$true] %s28
      %34 = dma.hbm_to_vmem [thread:$0]  %s1, 4096, %s29, [#allocation6], 128, 128, 8
    $region9: #{tpu_custom_call.1} parent=1 // pred_fallthru
      _
    // Predicated region
    $region10: #{tpu_custom_call.1} parent=1 // pred_check
      _
    $region11: #{tpu_custom_call.1} parent=1 // pred_check_branch
      %36 = sbr.rel (0) target = $region13
    $region12: #{tpu_custom_call.1} parent=1 // pred_region
      _
    $region13: #{tpu_custom_call.1} parent=1 // pred_fallthru
      _
    // Predicated region
    $region14: #{tpu_custom_call.1} parent=1 // pred_check
      _
    $region15: #{tpu_custom_call.1} parent=1 // pred_check_branch
      %38 = sbr.rel (0) target = $region17
    $region16: #{tpu_custom_call.1} parent=1 // pred_region
      %39 = dma.done [#allocation3], 512
    $region17: #{tpu_custom_call.1} parent=1 // pred_fallthru
      _
    // Predicated region
    $region18: #{tpu_custom_call.1} parent=1 // pred_check
      _
    $region19: #{tpu_custom_call.1} parent=1 // pred_check_branch
      %41 = sbr.rel (0) target = $region21
    $region20: #{tpu_custom_call.1} parent=1 // pred_region
      %42 = dma.done [#allocation6], 4096
    $region21: #{tpu_custom_call.1} parent=1 // pred_fallthru
      _
    %v43 = vld [vmem:[#allocation2] sm:$0xff]
    %v44 = vld [vmem:[#allocation2 + $0x8] sm:$0xff]
    %v45 = vld [vmem:[#allocation2 + $0x10] sm:$0xff]
    %v46 = vld [vmem:[#allocation2 + $0x18] sm:$0xff]
    %v47 = vld [vmem:[#allocation5] sm:$0xff]
    %v48 = vld [vmem:[#allocation5 + $0x8] sm:$0xff]
    %v49 = vld [vmem:[#allocation5 + $0x10] sm:$0xff]
    %v50 = vld [vmem:[#allocation5 + $0x18] sm:$0xff]
    %v51 = vld [vmem:[#allocation5 + $0x20] sm:$0xff]
    %v52 = vld [vmem:[#allocation5 + $0x28] sm:$0xff]
    %v53 = vld [vmem:[#allocation5 + $0x30] sm:$0xff]
    %v54 = vld [vmem:[#allocation5 + $0x38] sm:$0xff]
    %v55 = vld [vmem:[#allocation5 + $0x40] sm:$0xff]
    %v56 = vld [vmem:[#allocation5 + $0x48] sm:$0xff]
    %v57 = vld [vmem:[#allocation5 + $0x50] sm:$0xff]
    %v58 = vld [vmem:[#allocation5 + $0x58] sm:$0xff]
    %v59 = vld [vmem:[#allocation5 + $0x60] sm:$0xff]
    %v60 = vld [vmem:[#allocation5 + $0x68] sm:$0xff]
    %v61 = vld [vmem:[#allocation5 + $0x70] sm:$0xff]
    %v62 = vld [vmem:[#allocation5 + $0x78] sm:$0xff]
    %v63 = vld [vmem:[#allocation5 + $0x80] sm:$0xff]
    %v64 = vld [vmem:[#allocation5 + $0x88] sm:$0xff]
    %v65 = vld [vmem:[#allocation5 + $0x90] sm:$0xff]
    %v66 = vld [vmem:[#allocation5 + $0x98] sm:$0xff]
    %v67 = vld [vmem:[#allocation5 + $0xa0] sm:$0xff]
    %v68 = vld [vmem:[#allocation5 + $0xa8] sm:$0xff]
    %v69 = vld [vmem:[#allocation5 + $0xb0] sm:$0xff]
    %v70 = vld [vmem:[#allocation5 + $0xb8] sm:$0xff]
    %v71 = vld [vmem:[#allocation5 + $0xc0] sm:$0xff]
    %v72 = vld [vmem:[#allocation5 + $0xc8] sm:$0xff]
    %v73 = vld [vmem:[#allocation5 + $0xd0] sm:$0xff]
    %v74 = vld [vmem:[#allocation5 + $0xd8] sm:$0xff]
    %v75 = vld [vmem:[#allocation5 + $0xe0] sm:$0xff]
    %v76 = vld [vmem:[#allocation5 + $0xe8] sm:$0xff]
    %v77 = vld [vmem:[#allocation5 + $0xf0] sm:$0xff]
    %v78 = vld [vmem:[#allocation5 + $0xf8] sm:$0xff]
    %v79 = vld [vmem:[%s2] sm:$0x1]
    %v81 = vlaneseq
    %v82 = vshrl.u32 %v81, 7
    %v83 = vsub.s32 0, %v82
    %v84 = vrot.slane %v79, %v83
    %86 = vmatprep.subr.mxu0 0.0
    %87 = vmatpush1.msra.mxu0 %v47
    %88 = vmatprep.subr.mxu0 0.0
    %89 = vmatpush1.msra.mxu0 %v48
    %90 = vmatprep.subr.mxu0 0.0
    %91 = vmatpush1.msra.mxu0 %v49
    %92 = vmatprep.subr.mxu0 0.0
    %93 = vmatpush1.msra.mxu0 %v50
    %94 = vmatprep.subr.mxu0 0.0
    %95 = vmatpush1.msra.mxu0 %v51
    %96 = vmatprep.subr.mxu0 0.0
    %97 = vmatpush1.msra.mxu0 %v52
    %98 = vmatprep.subr.mxu0 0.0
    %99 = vmatpush1.msra.mxu0 %v53
    %100 = vmatprep.subr.mxu0 0.0
    %101 = vmatpush1.msra.mxu0 %v54
    %102 = vmatprep.subr.mxu0 0.0
    %103 = vmatpush1.msra.mxu0 %v55
    %104 = vmatprep.subr.mxu0 0.0
    %105 = vmatpush1.msra.mxu0 %v56
    %106 = vmatprep.subr.mxu0 0.0
    %107 = vmatpush1.msra.mxu0 %v57
    %108 = vmatprep.subr.mxu0 0.0
    %109 = vmatpush1.msra.mxu0 %v58
    %110 = vmatprep.subr.mxu0 0.0
    %111 = vmatpush1.msra.mxu0 %v59
    %112 = vmatprep.subr.mxu0 0.0
    %113 = vmatpush1.msra.mxu0 %v60
    %114 = vmatprep.subr.mxu0 0.0
    %115 = vmatpush1.msra.mxu0 %v61
    %116 = vmatprep.subr.mxu0 0.0
    %117 = vmatpush1.msra.mxu0 %v62
    %118 = vmatprep.subr.mxu0 0.0
    %119 = vmatpush1.msra.mxu0 %v63
    %120 = vmatprep.subr.mxu0 0.0
    %121 = vmatpush1.msra.mxu0 %v64
    %122 = vmatprep.subr.mxu0 0.0
    %123 = vmatpush1.msra.mxu0 %v65
    %124 = vmatprep.subr.mxu0 0.0
    %125 = vmatpush1.msra.mxu0 %v66
    %126 = vmatprep.subr.mxu0 0.0
    %127 = vmatpush1.msra.mxu0 %v67
    %128 = vmatprep.subr.mxu0 0.0
    %129 = vmatpush1.msra.mxu0 %v68
    %130 = vmatprep.subr.mxu0 0.0
    %131 = vmatpush1.msra.mxu0 %v69
    %132 = vmatprep.subr.mxu0 0.0
    %133 = vmatpush1.msra.mxu0 %v70
    %134 = vmatprep.subr.mxu0 0.0
    %135 = vmatpush1.msra.mxu0 %v71
    %136 = vmatprep.subr.mxu0 0.0
    %137 = vmatpush1.msra.mxu0 %v72
    %138 = vmatprep.subr.mxu0 0.0
    %139 = vmatpush1.msra.mxu0 %v73
    %140 = vmatprep.subr.mxu0 0.0
    %141 = vmatpush1.msra.mxu0 %v74
    %142 = vmatprep.subr.mxu0 0.0
    %143 = vmatpush1.msra.mxu0 %v75
    %144 = vmatprep.subr.mxu0 0.0
    %145 = vmatpush1.msra.mxu0 %v76
    %146 = vmatprep.subr.mxu0 0.0
    %147 = vmatpush1.msra.mxu0 %v77
    %148 = vmatprep.subr.mxu0 0.0
    %149 = vmatpush1.msra.mxu0 %v78
    %150 = vmatprep.mubr.f32.mxu0 %v44
    %151 = vmatmul.mubr.f32.gmra.mrb[0].mxu0 %v43
    %v152 = vpop.f32.mrb[0].mxu0
    %v153 = vadd.f32 %v84, %v152
    %v154 = vpop.f32.mrb[0].mxu0
    %155 = vmatprep.mubr.f32.mxu0 %v46
    %156 = vmatmul.mubr.f32.gmra.mrb[0].mxu0 %v45
    %v157 = vpop.f32.mrb[0].mxu0
    %v158 = vadd.f32 %v84, %v157
    %v159 = vpop.f32.mrb[0].mxu0
    %160 = vdwg.mxu0
    %161 = vst [vmem:[#allocation7] sm:$0xff] %v153
    %162 = vst [vmem:[#allocation7 + $0x8] sm:$0xff] %v158
    // Predicated region
    $region22: #{tpu_custom_call.1} parent=1 // pred_check
      _
    $region23: #{tpu_custom_call.1} parent=1 // pred_check_branch
      %164 = sbr.rel (0) target = $region25
    $region24: #{tpu_custom_call.1} parent=1 // pred_region
      %s166 = ssub.s32 256, 256
      %167 = vsyncadd [#allocation4], %s166
      %s168 = sshll.u32 [#allocation7], 4
      %s169 = int_to_ptr.vmem [resolvable:$true] %s168
      %174 = dma.vmem_to_hbm [thread:$0]  %s169, 256, %s3, [#allocation4], 128, 128, 8
    $region25: #{tpu_custom_call.1} parent=1 // pred_fallthru
      _
    // Predicated region
    $region26: #{tpu_custom_call.1} parent=1 // pred_check
      _
    $region27: #{tpu_custom_call.1} parent=1 // pred_check_branch
      %176 = sbr.rel (0) target = $region29
    $region28: #{tpu_custom_call.1} parent=1 // pred_region
      %177 = dma.done [#allocation4], 256
    $region29: #{tpu_custom_call.1} parent=1 // pred_fallthru
      _
    %178 = vsyncpa [#allocation3], 1
    %179 = vsyncpa [#allocation6], 1
    %180 = vsyncpa [#allocation4], 1

</llo_original>
